<compile_context>
chip_gen: v5e
topology: v5e:2x2
jax: 0.10.0
libtpu: 0.0.40
codegen_flags: <defaults>
</compile_context>

<pallas_src>
import functools

import jax
import jax.numpy as jnp
from jax.experimental import pallas as pl
from jax.experimental.pallas import tpu as pltpu

LANE = 128
SUBLANE = 8


def _rup(n, m):
    return ((n + m - 1) // m) * m


def _pad2(a, rows, cols):
    r, c = a.shape
    return jnp.pad(a, ((0, rows - r), (0, cols - c)))


# ----------------------------------------------------------------------------
# Parameter construction / packing
# ----------------------------------------------------------------------------
def init_encoder_params(key, input_dim, hidden_dim, c_dim):
    """Deterministic init mirroring the PyTorch module's layer shapes.

    Returns a flat list: [W1, b1, ..., Wn, bn, Wmu, bmu, Wlv, blv]
    where W's are stored (in, out) and b's are (1, out) — unpadded, f32.
    """
    layer_sizes = [input_dim + c_dim] + list(hidden_dim)
    params = []

    def linear(key, fan_in, fan_out):
        kw, kb = jax.random.split(key)
        bound = 1.0 / jnp.sqrt(float(fan_in))
        w = jax.random.uniform(kw, (fan_in, fan_out), jnp.float32, -bound, bound)
        b = jax.random.uniform(kb, (1, fan_out), jnp.float32, -bound, bound)
        return w, b

    keys = jax.random.split(key, len(layer_sizes) + 1)
    # hidden (Sequential) layers: all but the last pair of layer_sizes
    for i, (d0, d1) in enumerate(zip(layer_sizes[:-2], layer_sizes[1:-1])):
        w, b = linear(keys[i], d0, d1)
        params += [w, b]
    # mean + logvar heads: layer_sizes[-2] -> layer_sizes[-1]
    w_mu, b_mu = linear(keys[-2], layer_sizes[-2], layer_sizes[-1])
    w_lv, b_lv = linear(keys[-1], layer_sizes[-2], layer_sizes[-1])
    params += [w_mu, b_mu, w_lv, b_lv]
    return params


def pack_encoder_params(params, input_dim, c_dim, z_dim, param_dtype=jnp.float32):
    """Re-layout raw params for the kernel (done once, at init time).

    - first layer weight split into Y-rows and c-rows (so the wrapper never
      materializes concat([Y, c]) in HBM)
    - mu / logvar heads fused into one (hidden, 2*z_dim) matmul
    - every output/feature dim zero-padded to a multiple of 128 lanes
    - weights stored in `param_dtype` (bf16 on the MXU fast path -> no per-step
      casts, half the resident weight VMEM); biases stay f32 (f32 epilogue).

    Returns [W1y, W1c, b1, W2, b2, ..., Wn, bn, Whead, bhead]
    (or [Why, Whc, bhead] if there are no hidden encoder layers).
    """
    n_hidden = (len(params) - 4) // 2
    w_mu, b_mu, w_lv, b_lv = params[-4:]
    w_head = jnp.concatenate([w_mu, w_lv], axis=1)        # (h_last, 2*z_dim)
    b_head = jnp.concatenate([b_mu, b_lv], axis=1)        # (1, 2*z_dim)
    head_pad = _rup(2 * z_dim, LANE)

    def w_pack(w, rows, cols):
        return _pad2(w, rows, cols).astype(param_dtype)

    def b_pack(b, cols):
        return _pad2(b, 1, cols).astype(jnp.float32)

    packed = []
    if n_hidden == 0:
        packed.append(w_pack(w_head[:input_dim], input_dim, head_pad))
        packed.append(w_pack(w_head[input_dim:], c_dim, head_pad))
        packed.append(b_pack(b_head, head_pad))
        return packed

    w1, b1 = params[0], params[1]
    h1_pad = _rup(w1.shape[1], LANE)
    packed.append(w_pack(w1[:input_dim], input_dim, h1_pad))   # W1y
    packed.append(w_pack(w1[input_dim:], c_dim, h1_pad))       # W1c
    packed.append(b_pack(b1, h1_pad))

    prev_pad = h1_pad
    for i in range(1, n_hidden):
        w, b = params[2 * i], params[2 * i + 1]
        out_pad = _rup(w.shape[1], LANE)
        packed.append(w_pack(w, prev_pad, out_pad))
        packed.append(b_pack(b, out_pad))
        prev_pad = out_pad

    packed.append(w_pack(w_head, prev_pad, head_pad))
    packed.append(b_pack(b_head, head_pad))
    return packed


# ----------------------------------------------------------------------------
# Kernel
# ----------------------------------------------------------------------------
def _make_encoder_kernel(n_hidden_layers: int, non_linear: bool, compute_dtype):
    """Fused kernel: split first linear (+relu) -> hidden linears -> fused heads."""

    def mm(a, w):
        # Matmul in compute_dtype (bf16 fast path on v6e/v7x), f32 accumulate.
        # astype is a no-op when operands are already compute_dtype (packed/streamed).
        return jnp.dot(a.astype(compute_dtype), w.astype(compute_dtype),
                       preferred_element_type=jnp.float32)

    def kernel(y_ref, c_ref, *refs):
        # refs = [packed params ..., out_ref]
        param_refs, out_ref = refs[:-1], refs[-1]

        # First encoder layer (or fused head if no hidden layers): split matmul
        # over Y and c so the wrapper never materializes concat([Y, c]) in HBM.
        h = (mm(y_ref[...], param_refs[0][...])
             + mm(c_ref[...], param_refs[1][...])
             + param_refs[2][...])                      # f32 epilogue

        if n_hidden_layers == 0:
            out_ref[...] = h.astype(out_ref.dtype)
            return

        if non_linear:
            h = jnp.maximum(h, 0.0)                     # relu in f32 (v5e-safe)

        idx = 3
        for _ in range(n_hidden_layers - 1):
            h = mm(h, param_refs[idx][...]) + param_refs[idx + 1][...]
            idx += 2
            if non_linear:
                h = jnp.maximum(h, 0.0)

        # Fused mean|logvar head -> single lane-dense (TB, head_pad) store.
        out_ref[...] = (mm(h, param_refs[idx][...])
                        + param_refs[idx + 1][...]).astype(out_ref.dtype)

    return kernel


# ----------------------------------------------------------------------------
# Wrapper
# ----------------------------------------------------------------------------
def _vmem_budget_bytes():
    """Generation-aware VMEM budget: ~half of per-core VMEM capacity
    (≈64 MiB on v5e/v6e's 128 MiB, ≈32 MiB on v7x's 64 MiB)."""
    cap = 64 * 1024 * 1024            # conservative (v7x-sized) fallback
    try:
        cap = int(pltpu.get_tpu_info().vmem_capacity_bytes)
    except Exception:
        pass
    return max(16 * 1024 * 1024, cap // 2)


def _pick_batch_tile(requested, B, bytes_per_row, resident_bytes, vmem_budget,
                     min_steps=2):
    """Largest sublane-aligned batch tile that (a) fits the VMEM budget after the
    single-buffered resident weights and (b) still leaves >=min_steps grid steps
    (when B allows) so the "parallel" batch axis can shard across v7x's 2 TCs."""
    b_aligned = _rup(max(int(B), 1), SUBLANE)
    tb = min(_rup(int(requested), SUBLANE), b_aligned)
    budget = max(vmem_budget - resident_bytes, SUBLANE * bytes_per_row)
    while tb > SUBLANE and tb * bytes_per_row > budget:
        tb = max(SUBLANE, _rup(tb // 2, SUBLANE))
    # Megacore: guarantee at least `min_steps` tiles when the batch is big enough.
    while tb > SUBLANE and -(-b_aligned // tb) < min_steps:
        tb = max(SUBLANE, _rup(tb // 2, SUBLANE))
    return tb


@functools.partial(
    jax.jit,
    static_argnames=("c_dim", "z_dim", "non_linear", "compute_dtype",
                     "out_dtype", "batch_tile"),
)
def encoder_forward(Y, c, packed_params, *, c_dim, z_dim, non_linear,
                    compute_dtype=jnp.float32, out_dtype=None, batch_tile=4096):
    if out_dtype is None:
        out_dtype = compute_dtype            # bf16 path -> bf16 head writes (2x less)
    c = c.reshape(-1, c_dim)                 # glue: reshape (matches PyTorch)
    B, input_dim = Y.shape
    n_hidden = (len(packed_params) - 3) // 2
    head_pad = int(packed_params[-1].shape[-1])

    # Stream Y/c in the compute dtype (halves input DMA on the bf16 path).
    Y = Y.astype(compute_dtype)
    c = c.astype(compute_dtype)
    in_item = jnp.dtype(compute_dtype).itemsize
    out_item = jnp.dtype(out_dtype).itemsize

    # Static bookkeeping: matmul weights (for flops) and padded width chain
    # (for VMEM accounting).
    if n_hidden == 0:
        mm_weights = [packed_params[0], packed_params[1]]
        layer_out_widths = [head_pad]
    else:
        mm_weights = [packed_params[0], packed_params[1]]
        layer_out_widths = [int(packed_params[0].shape[1])]
        for k in range(n_hidden - 1):
            w = packed_params[3 + 2 * k]
            mm_weights.append(w)
            layer_out_widths.append(int(w.shape[1]))
        mm_weights.append(packed_params[-2])
        layer_out_widths.append(head_pad)

    weight_bytes = sum(int(p.size) * p.dtype.itemsize for p in packed_params)

    # Per batch-row VMEM footprint:
    #  - double-buffered Y/c/out pipeline streams
    #  - f32 intermediates: the two largest *consecutive* padded layer widths are
    #    live simultaneously (matmul input + output), not just the widest one.
    chain = [input_dim + c_dim] + layer_out_widths
    act_bpr = 4 * max(chain[i] + chain[i + 1] for i in range(len(chain) - 1))
    stream_bpr = 2 * ((input_dim + c_dim) * in_item + head_pad * out_item)
    bytes_per_row = stream_bpr + act_bpr

    vmem_budget = _vmem_budget_bytes()
    # Weights are single-buffered whole-array VMEM residents -> charged once.
    TB = _pick_batch_tile(batch_tile, B, bytes_per_row, weight_bytes, vmem_budget)

    Bp = _rup(B, TB)
    if Bp != B:
        # Pad the batch so every grid step sees a full, well-defined tile.
        Y = jnp.pad(Y, ((0, Bp - B), (0, 0)))
        c = jnp.pad(c, ((0, Bp - B), (0, 0)))

    kernel = _make_encoder_kernel(n_hidden, non_linear, compute_dtype)

    grid = (Bp // TB,)
    in_specs = [pl.BlockSpec((TB, input_dim), lambda i: (i, 0)),
                pl.BlockSpec((TB, c_dim), lambda i: (i, 0))]
    # Weights / biases: whole-array VMEM residents (copied in once, no grid
    # blocking, no double-buffering) -> halves resident weight VMEM vs the
    # previous constant-index-map pipelined blocks.
    in_specs += [pl.BlockSpec(memory_space=pltpu.MemorySpace.VMEM)
                 for _ in packed_params]
    out_spec = pl.BlockSpec((TB, head_pad), lambda i: (i, 0))

    flops = 2 * Bp * sum(int(w.shape[0]) * int(w.shape[1]) for w in mm_weights)
    bytes_accessed = (Bp * ((input_dim + c_dim) * in_item + head_pad * out_item)
                      + weight_bytes)

    out = pl.pallas_call(
        kernel,
        out_shape=jax.ShapeDtypeStruct((Bp, head_pad), out_dtype),
        grid=grid,
        in_specs=in_specs,
        out_specs=out_spec,
        compiler_params=pltpu.CompilerParams(
            dimension_semantics=("parallel",),        # megacore on v7x
            vmem_limit_bytes=int(vmem_budget)),       # consistent with tile budget
        cost_estimate=pl.CostEstimate(
            flops=int(flops), transcendentals=0,
            bytes_accessed=int(bytes_accessed)),
    )(Y, c, *packed_params)

    # Slice the real rows / real (unpadded) head columns back out; keep the
    # module's f32 interface regardless of the kernel's out_dtype.
    mu = out[:B, :z_dim].astype(jnp.float32)
    logvar = out[:B, z_dim:2 * z_dim].astype(jnp.float32)
    return mu, logvar


def encoder_forward_ref(Y, c, params, *, c_dim, non_linear):
    """Plain-JAX reference (unpadded params) for correctness checking."""
    c = c.reshape(-1, c_dim)
    x = jnp.concatenate([Y, c], axis=1)
    n_hidden = (len(params) - 4) // 2
    idx = 0
    for _ in range(n_hidden):
        x = x @ params[idx] + params[idx + 1]
        idx += 2
        if non_linear:
            x = jnp.maximum(x, 0.0)
    mu = x @ params[idx] + params[idx + 1]
    logvar = x @ params[idx + 2] + params[idx + 3]
    return mu, logvar


if __name__ == "__main__":
    # Small shapes consistent with the module's constructor:
    #   input_dim=16, hidden_dim=[32, 8] (z_dim=8), c_dim=4, non_linear=True
    B, input_dim, c_dim = 4, 16, 4
    hidden_dim = [32, 8]
    z_dim = hidden_dim[-1]
    non_linear = True

    key = jax.random.PRNGKey(0)
    k_y, k_c, k_p, k_y2, k_c2 = jax.random.split(key, 5)
    Y = jax.random.normal(k_y, (B, input_dim), jnp.float32)
    c = jax.random.normal(k_c, (B, c_dim), jnp.float32)

    params = init_encoder_params(k_p, input_dim, hidden_dim, c_dim)
    packed_f32 = pack_encoder_params(params, input_dim, c_dim, z_dim,
                                     param_dtype=jnp.float32)
    packed_bf16 = pack_encoder_params(params, input_dim, c_dim, z_dim,
                                      param_dtype=jnp.bfloat16)

    mu_ref, logvar_ref = encoder_forward_ref(
        Y, c, params, c_dim=c_dim, non_linear=non_linear
    )

    # f32 compute path: matches the PyTorch/f32 reference tightly.
    mu, logvar = encoder_forward(
        Y, c, packed_f32, c_dim=c_dim, z_dim=z_dim, non_linear=non_linear,
        compute_dtype=jnp.float32,
    )
    jax.block_until_ready((mu, logvar))
    assert mu.shape == (B, z_dim) and logvar.shape == (B, z_dim)
    assert jnp.allclose(mu, mu_ref, atol=2e-5, rtol=2e-5)
    assert jnp.allclose(logvar, logvar_ref, atol=2e-5, rtol=2e-5)

    # bf16 MXU fast path (v6e/v7x): bf16 weights/streams/output, f32 accumulate.
    mu_bf, logvar_bf = encoder_forward(
        Y, c, packed_bf16, c_dim=c_dim, z_dim=z_dim, non_linear=non_linear,
        compute_dtype=jnp.bfloat16,
    )
    jax.block_until_ready((mu_bf, logvar_bf))
    assert jnp.allclose(mu_bf, mu_ref, atol=5e-2, rtol=5e-2)
    assert jnp.allclose(logvar_bf, logvar_ref, atol=5e-2, rtol=5e-2)

    # Multi-tile grid + batch-padding path (exercises >=2 grid steps / megacore).
    B2 = 40
    Y2 = jax.random.normal(k_y2, (B2, input_dim), jnp.float32)
    c2 = jax.random.normal(k_c2, (B2, c_dim), jnp.float32)
    mu2_ref, logvar2_ref = encoder_forward_ref(
        Y2, c2, params, c_dim=c_dim, non_linear=non_linear
    )
    mu2, logvar2 = encoder_forward(
        Y2, c2, packed_f32, c_dim=c_dim, z_dim=z_dim, non_linear=non_linear,
        compute_dtype=jnp.float32,
    )
    jax.block_until_ready((mu2, logvar2))
    assert mu2.shape == (B2, z_dim) and logvar2.shape == (B2, z_dim)
    assert jnp.allclose(mu2, mu2_ref, atol=2e-5, rtol=2e-5)
    assert jnp.allclose(logvar2, logvar2_ref, atol=2e-5, rtol=2e-5)

    print("KERNEL_OK")
</pallas_src>

<mosaic_0001>
module attributes {stable_mosaic.version = 11 : i64} {
  func.func @kernel(%arg0: i32, %arg1: memref<8x16xf32, #tpu.memory_space<vmem>>, %arg2: memref<8x4xf32, #tpu.memory_space<vmem>>, %arg3: memref<16x128xf32, #tpu.memory_space<vmem>>, %arg4: memref<4x128xf32, #tpu.memory_space<vmem>>, %arg5: memref<1x128xf32, #tpu.memory_space<vmem>>, %arg6: memref<128x128xf32, #tpu.memory_space<vmem>>, %arg7: memref<1x128xf32, #tpu.memory_space<vmem>>, %arg8: memref<8x128xf32, #tpu.memory_space<vmem>>) attributes {dimension_semantics = [#tpu.dimension_semantics<parallel>], iteration_bounds = array<i64: 1>, scalar_prefetch = 0 : i64, scratch_operands = 0 : i64, tpu.core_type = #tpu.core_type<tc>, window_params = [{transform_indices = @transform_0, window_bounds = array<i64: 8, 16>}, {transform_indices = @transform_1, window_bounds = array<i64: 8, 4>}, {pipeline_mode = #tpu.pipeline_mode<synchronous>, transform_indices = @transform_2, window_bounds = array<i64: 16, 128>}, {pipeline_mode = #tpu.pipeline_mode<synchronous>, transform_indices = @transform_3, window_bounds = array<i64: 4, 128>}, {pipeline_mode = #tpu.pipeline_mode<synchronous>, transform_indices = @transform_4, window_bounds = array<i64: 1, 128>}, {pipeline_mode = #tpu.pipeline_mode<synchronous>, transform_indices = @transform_5, window_bounds = array<i64: 128, 128>}, {pipeline_mode = #tpu.pipeline_mode<synchronous>, transform_indices = @transform_6, window_bounds = array<i64: 1, 128>}, {transform_indices = @transform_7, window_bounds = array<i64: 8, 128>}]} {
    %c0 = arith.constant 0 : index
    %c0_0 = arith.constant 0 : index
    %0 = vector.load %arg1[%c0, %c0_0] : memref<8x16xf32, #tpu.memory_space<vmem>>, vector<8x16xf32>
    %c0_1 = arith.constant 0 : index
    %c0_2 = arith.constant 0 : index
    %1 = vector.load %arg3[%c0_1, %c0_2] : memref<16x128xf32, #tpu.memory_space<vmem>>, vector<16x128xf32>
    %cst = arith.constant dense<0.000000e+00> : vector<8x128xf32>
    %2 = tpu.matmul %0, %1, %cst {dimension_numbers = #tpu.dot_dimension_numbers<[1], [0], [0], [1], [0, 0, 1, 1], [], []>} : vector<8x16xf32>, vector<16x128xf32>, vector<8x128xf32> -> vector<8x128xf32>
    %c0_3 = arith.constant 0 : index
    %c0_4 = arith.constant 0 : index
    %3 = vector.load %arg2[%c0_3, %c0_4] : memref<8x4xf32, #tpu.memory_space<vmem>>, vector<8x4xf32>
    %c0_5 = arith.constant 0 : index
    %c0_6 = arith.constant 0 : index
    %4 = vector.load %arg4[%c0_5, %c0_6] : memref<4x128xf32, #tpu.memory_space<vmem>>, vector<4x128xf32>
    %cst_7 = arith.constant dense<0.000000e+00> : vector<8x128xf32>
    %5 = tpu.matmul %3, %4, %cst_7 {dimension_numbers = #tpu.dot_dimension_numbers<[1], [0], [0], [1], [0, 0, 1, 1], [], []>} : vector<8x4xf32>, vector<4x128xf32>, vector<8x128xf32> -> vector<8x128xf32>
    %6 = arith.addf %2, %5 : vector<8x128xf32>
    %c0_8 = arith.constant 0 : index
    %c0_9 = arith.constant 0 : index
    %7 = vector.load %arg5[%c0_8, %c0_9] : memref<1x128xf32, #tpu.memory_space<vmem>>, vector<1x128xf32>
    %8 = vector.broadcast %7 : vector<1x128xf32> to vector<8x128xf32>
    %9 = arith.addf %6, %8 : vector<8x128xf32>
    %cst_10 = arith.constant 0.000000e+00 : f32
    %10 = vector.broadcast %cst_10 : f32 to vector<8x128xf32>
    %11 = arith.maximumf %9, %10 : vector<8x128xf32>
    %c0_11 = arith.constant 0 : index
    %c0_12 = arith.constant 0 : index
    %12 = vector.load %arg6[%c0_11, %c0_12] : memref<128x128xf32, #tpu.memory_space<vmem>>, vector<128x128xf32>
    %cst_13 = arith.constant dense<0.000000e+00> : vector<8x128xf32>
    %13 = tpu.matmul %11, %12, %cst_13 {dimension_numbers = #tpu.dot_dimension_numbers<[1], [0], [0], [1], [0, 0, 1, 1], [], []>} : vector<8x128xf32>, vector<128x128xf32>, vector<8x128xf32> -> vector<8x128xf32>
    %c0_14 = arith.constant 0 : index
    %c0_15 = arith.constant 0 : index
    %14 = vector.load %arg7[%c0_14, %c0_15] : memref<1x128xf32, #tpu.memory_space<vmem>>, vector<1x128xf32>
    %15 = vector.broadcast %14 : vector<1x128xf32> to vector<8x128xf32>
    %16 = arith.addf %13, %15 : vector<8x128xf32>
    %c0_16 = arith.constant 0 : index
    %c0_17 = arith.constant 0 : index
    %17 = vector.load %arg8[%c0_16, %c0_17] : memref<8x128xf32, #tpu.memory_space<vmem>>, vector<8x128xf32>
    tpu.vector_store %arg8[%c0_16, %c0_17], %16 {strides = array<i32>} : memref<8x128xf32, #tpu.memory_space<vmem>>, vector<8x128xf32>,
    return
  }
  func.func @transform_0(%arg0: i32) -> (i32, i32) {
    %c0_i32 = arith.constant 0 : i32
    %c0_i32_0 = arith.constant 0 : i32
    return %arg0, %c0_i32 : i32, i32
  }
  func.func @transform_1(%arg0: i32) -> (i32, i32) {
    %c0_i32 = arith.constant 0 : i32
    %c0_i32_0 = arith.constant 0 : i32
    return %arg0, %c0_i32 : i32, i32
  }
  func.func @transform_2(%arg0: i32) -> (i32, i32) {
    %c0_i32 = arith.constant 0 : i32
    %c0_i32_0 = arith.constant 0 : i32
    %c0_i32_1 = arith.constant 0 : i32
    return %c0_i32, %c0_i32_0 : i32, i32
  }
  func.func @transform_3(%arg0: i32) -> (i32, i32) {
    %c0_i32 = arith.constant 0 : i32
    %c0_i32_0 = arith.constant 0 : i32
    %c0_i32_1 = arith.constant 0 : i32
    return %c0_i32, %c0_i32_0 : i32, i32
  }
  func.func @transform_4(%arg0: i32) -> (i32, i32) {
    %c0_i32 = arith.constant 0 : i32
    %c0_i32_0 = arith.constant 0 : i32
    %c0_i32_1 = arith.constant 0 : i32
    return %c0_i32, %c0_i32_0 : i32, i32
  }
  func.func @transform_5(%arg0: i32) -> (i32, i32) {
    %c0_i32 = arith.constant 0 : i32
    %c0_i32_0 = arith.constant 0 : i32
    %c0_i32_1 = arith.constant 0 : i32
    return %c0_i32, %c0_i32_0 : i32, i32
  }
  func.func @transform_6(%arg0: i32) -> (i32, i32) {
    %c0_i32 = arith.constant 0 : i32
    %c0_i32_0 = arith.constant 0 : i32
    %c0_i32_1 = arith.constant 0 : i32
    return %c0_i32, %c0_i32_0 : i32, i32
  }
  func.func @transform_7(%arg0: i32) -> (i32, i32) {
    %c0_i32 = arith.constant 0 : i32
    %c0_i32_0 = arith.constant 0 : i32
    return %arg0, %c0_i32 : i32, i32
  }
}

</mosaic_0001>

<llo_original>
// kernel: encoder_forward.1
$region0: #{encoder_forward.1}
  #allocation0 [shape = 'u32[]', space=smem, size = 0x4, offset = 0x4, fixed_abs, tag = 'smem constant byte address 0x4 - core index']
  #allocation1 [shape = 'u32[72,128]{1,0:T(1,128)}', space=vmem, size = 0x9000, scoped, tag = 'internal scratch']
  %s0 = inlined_call_operand.vmem [shape: f32[8,16], index: 0, kind: input, shape index: {}]
  %s1 = inlined_call_operand.vmem [shape: f32[8,4], index: 1, kind: input, shape index: {}]
  %s2 = inlined_call_operand.vmem [shape: f32[16,128], index: 2, kind: input, shape index: {}]
  %s3 = inlined_call_operand.vmem [shape: f32[4,128], index: 3, kind: input, shape index: {}]
  %s4 = inlined_call_operand.vmem [shape: f32[1,128], index: 4, kind: input, shape index: {}]
  %s5 = inlined_call_operand.hbm [shape: f32[128,128], index: 5, kind: input, shape index: {}]
  %s6 = inlined_call_operand.vmem [shape: f32[1,128], index: 6, kind: input, shape index: {}]
  %s7 = inlined_call_operand.vmem [shape: f32[8,128], index: 7, kind: output, shape index: {}]
  %s8 = sld [smem:[#allocation0]]
  $region42: #{encoder_forward.1} parent=0
    _
  %s10 = ssub.s32 1, %s8
  %s11 = scalar_select 0, %s10, %s8
  $region1: #{encoder_forward.1} parent=0
    #allocation2 [shape = 'u8[65536]{0}', space=vmem, size = 0x10000, scoped, tag = 'input window, operand 5, single buffered']
    #allocation3 [shape = 's32[1]{0}', space=sflag, size = 0x4, scoped, tag = 'scoped memory for encoder_forward.1']
    %12 = vsyncpa [#allocation3], 0
    // Predicated region
    $region2: #{encoder_forward.1} parent=1 // pred_check
      _
    $region3: #{encoder_forward.1} parent=1 // pred_check_branch
      %14 = sbr.rel (0) target = $region5
    $region4: #{encoder_forward.1} parent=1 // pred_region
      _
    $region5: #{encoder_forward.1} parent=1 // pred_fallthru
      _
    // Predicated region
    $region6: #{encoder_forward.1} parent=1 // pred_check
      _
    $region7: #{encoder_forward.1} parent=1 // pred_check_branch
      %16 = sbr.rel (0) target = $region9
    $region8: #{encoder_forward.1} parent=1 // pred_region
      _
    $region9: #{encoder_forward.1} parent=1 // pred_fallthru
      _
    // Predicated region
    $region10: #{encoder_forward.1} parent=1 // pred_check
      _
    $region11: #{encoder_forward.1} parent=1 // pred_check_branch
      %18 = sbr.rel (0) target = $region13
    $region12: #{encoder_forward.1} parent=1 // pred_region
      _
    $region13: #{encoder_forward.1} parent=1 // pred_fallthru
      _
    // Predicated region
    $region14: #{encoder_forward.1} parent=1 // pred_check
      _
    $region15: #{encoder_forward.1} parent=1 // pred_check_branch
      %20 = sbr.rel (0) target = $region17
    $region16: #{encoder_forward.1} parent=1 // pred_region
      _
    $region17: #{encoder_forward.1} parent=1 // pred_fallthru
      _
    // Predicated region
    $region18: #{encoder_forward.1} parent=1 // pred_check
      _
    $region19: #{encoder_forward.1} parent=1 // pred_check_branch
      %22 = sbr.rel (0) target = $region21
    $region20: #{encoder_forward.1} parent=1 // pred_region
      _
    $region21: #{encoder_forward.1} parent=1 // pred_fallthru
      _
    // Predicated region
    $region22: #{encoder_forward.1} parent=1 // pred_check
      _
    $region23: #{encoder_forward.1} parent=1 // pred_check_branch
      %24 = sbr.rel (0) target = $region25
    $region24: #{encoder_forward.1} parent=1 // pred_region
      %26 = vsyncadd [#allocation3], 0
      %s27 = sshll.u32 %s5, 4
      %s28 = int_to_ptr.hbm [resolvable:$true] %s27
      %s29 = sshll.u32 [#allocation2], 4
      %s30 = int_to_ptr.vmem [resolvable:$true] %s29
      %35 = dma.hbm_to_vmem [thread:$0]  %s28, 2048, %s30, [#allocation3], 128, 128, 8
    $region25: #{encoder_forward.1} parent=1 // pred_fallthru
      _
    // Predicated region
    $region26: #{encoder_forward.1} parent=1 // pred_check
      _
    $region27: #{encoder_forward.1} parent=1 // pred_check_branch
      %37 = sbr.rel (0) target = $region29
    $region28: #{encoder_forward.1} parent=1 // pred_region
      _
    $region29: #{encoder_forward.1} parent=1 // pred_fallthru
      _
    // Predicated region
    $region30: #{encoder_forward.1} parent=1 // pred_check
      _
    $region31: #{encoder_forward.1} parent=1 // pred_check_branch
      %39 = sbr.rel (0) target = $region33
    $region32: #{encoder_forward.1} parent=1 // pred_region
      %41 = dma.done [#allocation3], 2048
    $region33: #{encoder_forward.1} parent=1 // pred_fallthru
      _
    %v42 = vld [vmem:[%s0] sm:$0xff]
    %v43 = vld [vmem:[%s2] sm:$0xff]
    %v44 = vld [vmem:[%s2 + $0x8] sm:$0xff]
    %v45 = vld [vmem:[%s1] sm:$0xff]
    %v46 = vld [vmem:[%s3] sm:$0xf]
    %vm47 = vcmask 31744
    %v49 = vsel %vm47, %v45, 0
    %vm51 = vcmask 1043456
    %v53 = vsel %vm51, %v46, 0
    %55 = vmatpush.msra.mxu0 0.0
    %56 = vmatpush.msra.mxu0 0.0
    %57 = vmatpush.msra.mxu0 0.0
    %58 = vmatpush.msra.mxu0 0.0
    %59 = vmatpush.msra.mxu0 0.0
    %60 = vmatpush.msra.mxu0 0.0
    %61 = vmatpush.msra.mxu0 0.0
    %62 = vmatpush.msra.mxu0 0.0
    %63 = vmatpush.msra.mxu0 0.0
    %64 = vmatpush.msra.mxu0 0.0
    %65 = vmatpush.msra.mxu0 0.0
    %66 = vmatpush.msra.mxu0 0.0
    %67 = vmatpush.msra.mxu0 0.0
    %68 = vmatpush.msra.mxu0 0.0
    %69 = vmatpush.msra.mxu0 0.0
    %70 = vmatpush.msra.mxu0 %v53
    %71 = vmatmul.f32.gmra.mxu0 %v49
    %v72 = vpop.f32.mrf.mxu0
    %v73 = vadd.f32 0.0, %v72
    %74 = vdwg.mxu0
    %vm75 = vcmask 130048
    %v77 = vsel %vm75, %v42, 0
    %79 = vmatpush.msra.mxu0 0.0
    %80 = vmatpush.msra.mxu0 0.0
    %81 = vmatpush.msra.mxu0 0.0
    %82 = vmatpush.msra.mxu0 0.0
    %83 = vmatpush.msra.mxu0 0.0
    %84 = vmatpush.msra.mxu0 0.0
    %85 = vmatpush.msra.mxu0 0.0
    %86 = vmatpush.msra.mxu0 0.0
    %87 = vmatpush.msra.mxu0 0.0
    %88 = vmatpush.msra.mxu0 0.0
    %89 = vmatpush.msra.mxu0 0.0
    %90 = vmatpush.msra.mxu0 0.0
    %91 = vmatpush.msra.mxu0 0.0
    %92 = vmatpush.msra.mxu0 0.0
    %93 = vmatpush.msra.mxu0 %v44
    %94 = vmatpush.msra.mxu0 %v43
    %95 = vmatmul.f32.gmra.mxu0 %v77
    %v96 = vpop.f32.mrf.mxu0
    %v97 = vadd.f32 %v73, %v96
    %98 = vdwg.mxu0
    %v99 = vld [vmem:[%s4] sm:$0x1]
    %v101 = vperm.slane %v99, 0
    %v103 = vadd.f32 %v97, %v101
    %v104 = vmax.f32 %v103, 0.0
    %v105 = vld [vmem:[#allocation2] sm:$0xff]
    %v106 = vld [vmem:[#allocation2 + $0x8] sm:$0xff]
    %v107 = vld [vmem:[#allocation2 + $0x10] sm:$0xff]
    %v108 = vld [vmem:[#allocation2 + $0x18] sm:$0xff]
    %v109 = vld [vmem:[#allocation2 + $0x20] sm:$0xff]
    %v110 = vld [vmem:[#allocation2 + $0x28] sm:$0xff]
    %v111 = vld [vmem:[#allocation2 + $0x30] sm:$0xff]
    %v112 = vld [vmem:[#allocation2 + $0x38] sm:$0xff]
    %v113 = vld [vmem:[#allocation2 + $0x40] sm:$0xff]
    %v114 = vld [vmem:[#allocation2 + $0x48] sm:$0xff]
    %v115 = vld [vmem:[#allocation2 + $0x50] sm:$0xff]
    %v116 = vld [vmem:[#allocation2 + $0x58] sm:$0xff]
    %v117 = vld [vmem:[#allocation2 + $0x60] sm:$0xff]
    %v118 = vld [vmem:[#allocation2 + $0x68] sm:$0xff]
    %v119 = vld [vmem:[#allocation2 + $0x70] sm:$0xff]
    %v120 = vld [vmem:[#allocation2 + $0x78] sm:$0xff]
    %v121 = vld [vmem:[%s6] sm:$0x1]
    %v123 = vperm.slane %v121, 0
    %125 = vmatpush.msra.mxu0 %v120
    %126 = vmatpush.msra.mxu0 %v119
    %127 = vmatpush.msra.mxu0 %v118
    %128 = vmatpush.msra.mxu0 %v117
    %129 = vmatpush.msra.mxu0 %v116
    %130 = vmatpush.msra.mxu0 %v115
    %131 = vmatpush.msra.mxu0 %v114
    %132 = vmatpush.msra.mxu0 %v113
    %133 = vmatpush.msra.mxu0 %v112
    %134 = vmatpush.msra.mxu0 %v111
    %135 = vmatpush.msra.mxu0 %v110
    %136 = vmatpush.msra.mxu0 %v109
    %137 = vmatpush.msra.mxu0 %v108
    %138 = vmatpush.msra.mxu0 %v107
    %139 = vmatpush.msra.mxu0 %v106
    %140 = vmatpush.msra.mxu0 %v105
    %141 = vmatmul.f32.gmra.mxu0 %v104
    %v142 = vpop.f32.mrf.mxu0
    %v143 = vadd.f32 %v123, %v142
    %144 = vdwg.mxu0
    %145 = vst [vmem:[%s7] sm:$0xff] %v143
    // Predicated region
    $region34: #{encoder_forward.1} parent=1 // pred_check
      _
    $region35: #{encoder_forward.1} parent=1 // pred_check_branch
      %147 = sbr.rel (0) target = $region37
    $region36: #{encoder_forward.1} parent=1 // pred_region
      _
    $region37: #{encoder_forward.1} parent=1 // pred_fallthru
      _
    // Predicated region
    $region38: #{encoder_forward.1} parent=1 // pred_check
      _
    $region39: #{encoder_forward.1} parent=1 // pred_check_branch
      %149 = sbr.rel (0) target = $region41
    $region40: #{encoder_forward.1} parent=1 // pred_region
      _
    $region41: #{encoder_forward.1} parent=1 // pred_fallthru
      _
    %150 = vsyncpa [#allocation3], 1

</llo_original>
